<compile_context>
chip_gen: v7x
topology: tpu7x:2x2x1
jax: 0.10.0
libtpu: 0.0.40
codegen_flags: <defaults>
</compile_context>

<pallas_src>
import jax
import jax.numpy as jnp
from jax import lax
from jax.experimental import pallas as pl
from jax.experimental.pallas import tpu as pltpu

FULL_ATOM_FEATURE_DIMS = [119, 12, 5, 7, 10, 7, 12]
NUM_FEAT = len(FULL_ATOM_FEATURE_DIMS)
FEAT_PAD = 8                      # index rows padded 7 -> 8 sublanes


def _round_up(v, m):
    return ((v + m - 1) // m) * m


# Per-table row spans padded to 16-row boundaries (bf16 packed-vreg aligned).
PADDED_DIMS = [_round_up(d, 16) for d in FULL_ATOM_FEATURE_DIMS]  # [128,16,...]
_PAD_OFFSETS = []
_acc = 0
for _d in PADDED_DIMS:
    _PAD_OFFSETS.append(_acc)
    _acc += _d
OCCUPIED = _acc                   # 224 rows actually compared / written
V_PAD = 256                       # MXU contraction axis (2 x 128)

# Default atom tile.  At TILE_N=2048 the double-buffered int8 index tile,
# resident bf16 W^T, double-buffered f32 (E,TILE_N) output and the bf16
# (256,TILE_N) scratch stay far below the scoped-VMEM default on v5e/v6e/v7x.
TILE_N = 2048


def atom_encoder_kernel(xt_ref, wt_ref, ot_ref, hot_ref):
    # xt_ref : (FEAT_PAD, TILE_N) int8   -- raw feature indices, atoms on lanes
    # wt_ref : (E, V_PAD)         bf16   -- transposed packed tables (resident)
    # ot_ref : (E, TILE_N)        f32    -- transposed output tile (lane-dense)
    # hot_ref: (V_PAD, TILE_N)    bf16   -- multi-hot^T scratch
    tn = xt_ref.shape[1]
    xv = xt_ref[...].astype(jnp.int32)                  # widen int8 -> int32 once

    # Zero only the unused tail rows; redone every step (megacore-safe, ~32 rows).
    hot_ref[pl.ds(OCCUPIED, V_PAD - OCCUPIED), :] = jnp.zeros(
        (V_PAD - OCCUPIED, tn), hot_ref.dtype)

    # Range-restricted one-hot build: each feature only touches its own padded
    # row span; disjoint spans, so each compare is cast + stored directly
    # (no OR accumulation, no full-height cast pass).
    for i in range(NUM_FEAT):                           # static, unrolled (7)
        off = _PAD_OFFSETS[i]
        span = PADDED_DIMS[i]
        row = lax.broadcasted_iota(jnp.int32, (span, tn), 0)   # (span, TILE_N)
        idx = xv[i:i + 1, :]                                   # (1, TILE_N)
        hot_ref[pl.ds(off, span), :] = (row == idx).astype(hot_ref.dtype)

    # Sum of 7 embedding lookups == W^T @ multi_hot^T (bf16 MXU, f32 accumulate).
    ot_ref[...] = jnp.dot(wt_ref[...], hot_ref[...],
                          preferred_element_type=jnp.float32)


def pack_atom_tables(tables, emb_dtype=jnp.bfloat16):
    """Pack 7 per-feature (dim_i, E) f32 tables -> (E, V_PAD) transposed table."""
    e = tables[0].shape[1]
    w = jnp.zeros((V_PAD, e), jnp.float32)
    for t, off in zip(tables, _PAD_OFFSETS):
        w = w.at[off:off + t.shape[0], :].set(t)
    return jnp.transpose(w).astype(emb_dtype)           # (E, V_PAD)


def _pick_tile(n, tile_n):
    # Shrink the tile for small inputs (avoid huge padded-atom waste) and aim
    # for >= 2 grid steps so both v7x TensorCores get work.
    half = -(-n // 2)                                    # ceil(n / 2)
    half_aligned = _round_up(max(half, 1), 128)
    return max(128, min(tile_n, half_aligned))


def atom_encoder(x, w_concat_t, *, tile_n=TILE_N):
    """x: (N, 7) int; w_concat_t: (E, V_PAD) bf16 from pack_atom_tables -> (N, E) f32."""
    n = x.shape[0]
    e = w_concat_t.shape[0]
    tile_n = _pick_tile(n, tile_n)
    n_pad = _round_up(n, tile_n)

    # int8 index stream (all vocab sizes <= 119): 4x less index DMA per tile.
    xt = jnp.transpose(x).astype(jnp.int8)               # (7, N), atoms on lanes
    xt = jnp.pad(xt, ((0, FEAT_PAD - NUM_FEAT), (0, n_pad - n)))   # (8, n_pad)

    grid = (n_pad // tile_n,)
    cost = pl.CostEstimate(
        flops=2 * n_pad * V_PAD * e,
        transcendentals=0,
        bytes_accessed=xt.size * 1 + w_concat_t.size * 2 + n_pad * e * 4,
    )

    out_t = pl.pallas_call(
        atom_encoder_kernel,
        out_shape=jax.ShapeDtypeStruct((e, n_pad), jnp.float32),
        grid_spec=pltpu.PrefetchScalarGridSpec(
            num_scalar_prefetch=0,
            grid=grid,
            in_specs=[
                # (8, tile_n) int8 index tile per grid step (8 == full dim).
                pl.BlockSpec((FEAT_PAD, tile_n), lambda i: (0, i)),
                # Whole transposed table, constant index -> DMA'd once, resident.
                # (pl.Buffered(1) single-buffering considered; skipped - table is
                #  tiny and a second buffer costs ~E*512 bytes.)
                pl.BlockSpec((e, V_PAD), lambda i: (0, 0)),
            ],
            out_specs=pl.BlockSpec((e, tile_n), lambda i: (0, i)),
            scratch_shapes=[pltpu.VMEM((V_PAD, tile_n), jnp.bfloat16)],
        ),
        compiler_params=pltpu.CompilerParams(
            dimension_semantics=("parallel",),
        ),
        cost_estimate=cost,
    )(xt, w_concat_t)

    # Keep transposed kernel layout (lane-dense stores for small E) and undo it
    # once here; for emb_dim >= 128 a natural-orientation kernel would skip this.
    return jnp.transpose(out_t)[:n, :]                   # (N, E) f32


if __name__ == "__main__":
    key = jax.random.PRNGKey(0)
    emb_dim = 32
    N = 8  # number of atoms

    # Deterministic xavier_uniform-style init per table (as in the PyTorch module).
    tables = []
    for dim in FULL_ATOM_FEATURE_DIMS:
        key, sub = jax.random.split(key)
        bound = (6.0 / (dim + emb_dim)) ** 0.5
        tables.append(
            jax.random.uniform(sub, (dim, emb_dim), jnp.float32, -bound, bound))

    # Packed transposed bf16 table fed to the kernel (built once, outside kernel).
    w_concat_t = pack_atom_tables(tables)                 # (32, 256) bf16

    # Deterministic integer atom features, each column within its vocab size.
    key, sub = jax.random.split(key)
    maxes = jnp.asarray(FULL_ATOM_FEATURE_DIMS, jnp.int32)
    u = jax.random.uniform(sub, (N, NUM_FEAT))
    x = jnp.clip(jnp.floor(u * maxes[None, :]).astype(jnp.int32),
                 0, maxes[None, :] - 1)                   # (8, 7) int32

    out = atom_encoder(x, w_concat_t)
    out = jax.block_until_ready(out)

    # Pure-JAX reference: sum of per-feature embedding lookups against the same
    # bf16-rounded weights the kernel uses (one-hot 0/1 values are exact).
    # NOTE: relative to PyTorch's f32 nn.Embedding this carries bf16 weight
    # quantization (~1e-2 relative); accumulation itself is f32.
    ref = jnp.zeros((N, emb_dim), jnp.float32)
    for i in range(NUM_FEAT):
        t_bf = tables[i].astype(jnp.bfloat16).astype(jnp.float32)
        ref = ref + jnp.take(t_bf, x[:, i], axis=0)

    assert out.shape == (N, emb_dim) and out.dtype == jnp.float32
    assert jnp.allclose(out, ref, atol=1e-4, rtol=1e-4), \
        "Pallas output mismatch vs reference"
    # TODO(synk): no bounds checking on feature indices (PyTorch nn.Embedding
    # raises on out-of-range ids; here they silently hit a pad row / neighbor).
    print("KERNEL_OK")
</pallas_src>

<mosaic_0001>
module attributes {stable_mosaic.version = 11 : i64} {
  func.func @atom_encoder_kernel(%arg0: i32, %arg1: memref<8x128xi8, #tpu.memory_space<vmem>>, %arg2: memref<32x256xbf16, #tpu.memory_space<vmem>>, %arg3: memref<32x128xf32, #tpu.memory_space<vmem>>, %arg4: memref<256x128xbf16, #tpu.memory_space<vmem>>) attributes {dimension_semantics = [#tpu.dimension_semantics<parallel>], iteration_bounds = array<i64: 1>, scalar_prefetch = 0 : i64, scratch_operands = 1 : i64, tpu.core_type = #tpu.core_type<tc>, window_params = [{transform_indices = @transform_0, window_bounds = array<i64: 8, 128>}, {pipeline_mode = #tpu.pipeline_mode<synchronous>, transform_indices = @transform_1, window_bounds = array<i64: 32, 256>}, {transform_indices = @transform_2, window_bounds = array<i64: 32, 128>}]} {
    %c0 = arith.constant 0 : index
    %c0_0 = arith.constant 0 : index
    %0 = vector.load %arg1[%c0, %c0_0] : memref<8x128xi8, #tpu.memory_space<vmem>>, vector<8x128xi8>
    %1 = arith.extsi %0 : vector<8x128xi8> to vector<8x128xi32>
    %cst = arith.constant 0.000000e+00 : bf16
    %2 = vector.broadcast %cst : bf16 to vector<32x128xbf16>
    %c224 = arith.constant 224 : index
    %c0_1 = arith.constant 0 : index
    %3 = vector.load %arg4[%c224, %c0_1] : memref<256x128xbf16, #tpu.memory_space<vmem>>, vector<32x128xbf16>
    tpu.vector_store %arg4[%c224, %c0_1], %2 {strides = array<i32>} : memref<256x128xbf16, #tpu.memory_space<vmem>>, vector<32x128xbf16>,
    %4 = tpu.iota {dimensions = array<i32: 0>} : vector<128x128xi32>
    %5 = vector.extract_strided_slice %1 {offsets = [0, 0], sizes = [1, 128], strides = [1, 1]} : vector<8x128xi32> to vector<1x128xi32>
    %6 = vector.broadcast %5 : vector<1x128xi32> to vector<128x128xi32>
    %7 = arith.cmpi eq, %4, %6 : vector<128x128xi32>
    %8 = arith.extui %7 : vector<128x128xi1> to vector<128x128xi32>
    %9 = arith.sitofp %8 : vector<128x128xi32> to vector<128x128xf32>
    %10 = arith.truncf %9 : vector<128x128xf32> to vector<128x128xbf16>
    %c0_2 = arith.constant 0 : index
    %c0_3 = arith.constant 0 : index
    %11 = vector.load %arg4[%c0_2, %c0_3] : memref<256x128xbf16, #tpu.memory_space<vmem>>, vector<128x128xbf16>
    tpu.vector_store %arg4[%c0_2, %c0_3], %10 {strides = array<i32>} : memref<256x128xbf16, #tpu.memory_space<vmem>>, vector<128x128xbf16>,
    %12 = tpu.iota {dimensions = array<i32: 0>} : vector<16x128xi32>
    %13 = vector.extract_strided_slice %1 {offsets = [1, 0], sizes = [1, 128], strides = [1, 1]} : vector<8x128xi32> to vector<1x128xi32>
    %14 = vector.broadcast %13 : vector<1x128xi32> to vector<16x128xi32>
    %15 = arith.cmpi eq, %12, %14 : vector<16x128xi32>
    %16 = arith.extui %15 : vector<16x128xi1> to vector<16x128xi32>
    %17 = arith.sitofp %16 : vector<16x128xi32> to vector<16x128xf32>
    %18 = arith.truncf %17 : vector<16x128xf32> to vector<16x128xbf16>
    %c128 = arith.constant 128 : index
    %c0_4 = arith.constant 0 : index
    %19 = vector.load %arg4[%c128, %c0_4] : memref<256x128xbf16, #tpu.memory_space<vmem>>, vector<16x128xbf16>
    tpu.vector_store %arg4[%c128, %c0_4], %18 {strides = array<i32>} : memref<256x128xbf16, #tpu.memory_space<vmem>>, vector<16x128xbf16>,
    %20 = tpu.iota {dimensions = array<i32: 0>} : vector<16x128xi32>
    %21 = vector.extract_strided_slice %1 {offsets = [2, 0], sizes = [1, 128], strides = [1, 1]} : vector<8x128xi32> to vector<1x128xi32>
    %22 = vector.broadcast %21 : vector<1x128xi32> to vector<16x128xi32>
    %23 = arith.cmpi eq, %20, %22 : vector<16x128xi32>
    %24 = arith.extui %23 : vector<16x128xi1> to vector<16x128xi32>
    %25 = arith.sitofp %24 : vector<16x128xi32> to vector<16x128xf32>
    %26 = arith.truncf %25 : vector<16x128xf32> to vector<16x128xbf16>
    %c144 = arith.constant 144 : index
    %c0_5 = arith.constant 0 : index
    %27 = vector.load %arg4[%c144, %c0_5] : memref<256x128xbf16, #tpu.memory_space<vmem>>, vector<16x128xbf16>
    tpu.vector_store %arg4[%c144, %c0_5], %26 {strides = array<i32>} : memref<256x128xbf16, #tpu.memory_space<vmem>>, vector<16x128xbf16>,
    %28 = tpu.iota {dimensions = array<i32: 0>} : vector<16x128xi32>
    %29 = vector.extract_strided_slice %1 {offsets = [3, 0], sizes = [1, 128], strides = [1, 1]} : vector<8x128xi32> to vector<1x128xi32>
    %30 = vector.broadcast %29 : vector<1x128xi32> to vector<16x128xi32>
    %31 = arith.cmpi eq, %28, %30 : vector<16x128xi32>
    %32 = arith.extui %31 : vector<16x128xi1> to vector<16x128xi32>
    %33 = arith.sitofp %32 : vector<16x128xi32> to vector<16x128xf32>
    %34 = arith.truncf %33 : vector<16x128xf32> to vector<16x128xbf16>
    %c160 = arith.constant 160 : index
    %c0_6 = arith.constant 0 : index
    %35 = vector.load %arg4[%c160, %c0_6] : memref<256x128xbf16, #tpu.memory_space<vmem>>, vector<16x128xbf16>
    tpu.vector_store %arg4[%c160, %c0_6], %34 {strides = array<i32>} : memref<256x128xbf16, #tpu.memory_space<vmem>>, vector<16x128xbf16>,
    %36 = tpu.iota {dimensions = array<i32: 0>} : vector<16x128xi32>
    %37 = vector.extract_strided_slice %1 {offsets = [4, 0], sizes = [1, 128], strides = [1, 1]} : vector<8x128xi32> to vector<1x128xi32>
    %38 = vector.broadcast %37 : vector<1x128xi32> to vector<16x128xi32>
    %39 = arith.cmpi eq, %36, %38 : vector<16x128xi32>
    %40 = arith.extui %39 : vector<16x128xi1> to vector<16x128xi32>
    %41 = arith.sitofp %40 : vector<16x128xi32> to vector<16x128xf32>
    %42 = arith.truncf %41 : vector<16x128xf32> to vector<16x128xbf16>
    %c176 = arith.constant 176 : index
    %c0_7 = arith.constant 0 : index
    %43 = vector.load %arg4[%c176, %c0_7] : memref<256x128xbf16, #tpu.memory_space<vmem>>, vector<16x128xbf16>
    tpu.vector_store %arg4[%c176, %c0_7], %42 {strides = array<i32>} : memref<256x128xbf16, #tpu.memory_space<vmem>>, vector<16x128xbf16>,
    %44 = tpu.iota {dimensions = array<i32: 0>} : vector<16x128xi32>
    %45 = vector.extract_strided_slice %1 {offsets = [5, 0], sizes = [1, 128], strides = [1, 1]} : vector<8x128xi32> to vector<1x128xi32>
    %46 = vector.broadcast %45 : vector<1x128xi32> to vector<16x128xi32>
    %47 = arith.cmpi eq, %44, %46 : vector<16x128xi32>
    %48 = arith.extui %47 : vector<16x128xi1> to vector<16x128xi32>
    %49 = arith.sitofp %48 : vector<16x128xi32> to vector<16x128xf32>
    %50 = arith.truncf %49 : vector<16x128xf32> to vector<16x128xbf16>
    %c192 = arith.constant 192 : index
    %c0_8 = arith.constant 0 : index
    %51 = vector.load %arg4[%c192, %c0_8] : memref<256x128xbf16, #tpu.memory_space<vmem>>, vector<16x128xbf16>
    tpu.vector_store %arg4[%c192, %c0_8], %50 {strides = array<i32>} : memref<256x128xbf16, #tpu.memory_space<vmem>>, vector<16x128xbf16>,
    %52 = tpu.iota {dimensions = array<i32: 0>} : vector<16x128xi32>
    %53 = vector.extract_strided_slice %1 {offsets = [6, 0], sizes = [1, 128], strides = [1, 1]} : vector<8x128xi32> to vector<1x128xi32>
    %54 = vector.broadcast %53 : vector<1x128xi32> to vector<16x128xi32>
    %55 = arith.cmpi eq, %52, %54 : vector<16x128xi32>
    %56 = arith.extui %55 : vector<16x128xi1> to vector<16x128xi32>
    %57 = arith.sitofp %56 : vector<16x128xi32> to vector<16x128xf32>
    %58 = arith.truncf %57 : vector<16x128xf32> to vector<16x128xbf16>
    %c208 = arith.constant 208 : index
    %c0_9 = arith.constant 0 : index
    %59 = vector.load %arg4[%c208, %c0_9] : memref<256x128xbf16, #tpu.memory_space<vmem>>, vector<16x128xbf16>
    tpu.vector_store %arg4[%c208, %c0_9], %58 {strides = array<i32>} : memref<256x128xbf16, #tpu.memory_space<vmem>>, vector<16x128xbf16>,
    %c0_10 = arith.constant 0 : index
    %c0_11 = arith.constant 0 : index
    %60 = vector.load %arg2[%c0_10, %c0_11] : memref<32x256xbf16, #tpu.memory_space<vmem>>, vector<32x256xbf16>
    %c0_12 = arith.constant 0 : index
    %c0_13 = arith.constant 0 : index
    %61 = vector.load %arg4[%c0_12, %c0_13] : memref<256x128xbf16, #tpu.memory_space<vmem>>, vector<256x128xbf16>
    %cst_14 = arith.constant dense<0.000000e+00> : vector<32x128xf32>
    %62 = tpu.matmul %60, %61, %cst_14 {dimension_numbers = #tpu.dot_dimension_numbers<[1], [0], [0], [1], [0, 0, 1, 1], [], []>} : vector<32x256xbf16>, vector<256x128xbf16>, vector<32x128xf32> -> vector<32x128xf32>
    %c0_15 = arith.constant 0 : index
    %c0_16 = arith.constant 0 : index
    %63 = vector.load %arg3[%c0_15, %c0_16] : memref<32x128xf32, #tpu.memory_space<vmem>>, vector<32x128xf32>
    tpu.vector_store %arg3[%c0_15, %c0_16], %62 {strides = array<i32>} : memref<32x128xf32, #tpu.memory_space<vmem>>, vector<32x128xf32>,
    return
  }
  func.func @transform_0(%arg0: i32) -> (i32, i32) {
    %c0_i32 = arith.constant 0 : i32
    %c0_i32_0 = arith.constant 0 : i32
    return %c0_i32, %arg0 : i32, i32
  }
  func.func @transform_1(%arg0: i32) -> (i32, i32) {
    %c0_i32 = arith.constant 0 : i32
    %c0_i32_0 = arith.constant 0 : i32
    %c0_i32_1 = arith.constant 0 : i32
    return %c0_i32, %c0_i32_0 : i32, i32
  }
  func.func @transform_2(%arg0: i32) -> (i32, i32) {
    %c0_i32 = arith.constant 0 : i32
    %c0_i32_0 = arith.constant 0 : i32
    return %c0_i32, %arg0 : i32, i32
  }
}

</mosaic_0001>

<llo_original>
// kernel: tpu_custom_call.1
$region0: #{tpu_custom_call.1}
  #allocation0 [shape = 'u32[]', space=smem, size = 0x4, offset = 0x4, fixed_abs, tag = 'smem constant byte address 0x4 - core index']
  #allocation1 [shape = 'u32[144,128]{1,0:T(1,128)}', space=vmem, size = 0x12000, scoped, tag = 'internal scratch']
  #allocation2 [shape = 'bf16[256,128]{1,0:T(16,128)(2,1)}', space=vmem, size = 0x10000, scoped, tag = 'scratch operand']
  %s0 = inlined_call_operand.hbm [shape: s8[8,128], index: 0, kind: input, shape index: {}]
  %s1 = inlined_call_operand.hbm [shape: bf16[32,256], index: 1, kind: input, shape index: {}]
  %s2 = inlined_call_operand.hbm [shape: f32[32,128], index: 2, kind: output, shape index: {}]
  %s3 = sld [smem:[#allocation0]]
  $region26: #{tpu_custom_call.1} parent=0
    _
  %s5 = ssub.s32 1, %s3
  %s6 = scalar_select 0, %s5, %s3
  $region1: #{tpu_custom_call.1} parent=0
    #allocation3 [shape = 'u8[1024]{0}', space=vmem, size = 0x400, scoped, tag = 'input window, operand 0, single buffered']
    #allocation4 [shape = 's32[1]{0}', space=sflag, size = 0x4, scoped, tag = 'scoped memory for tpu_custom_call.1']
    #allocation5 [shape = 's32[1]{0}', space=sflag, size = 0x4, scoped, tag = 'scoped memory for tpu_custom_call.1']
    #allocation6 [shape = 'u8[16384]{0}', space=vmem, size = 0x4000, scoped, tag = 'input window, operand 1, single buffered']
    #allocation7 [shape = 's32[1]{0}', space=sflag, size = 0x4, scoped, tag = 'scoped memory for tpu_custom_call.1']
    #allocation8 [shape = 'u8[16384]{0}', space=vmem, size = 0x4000, scoped, tag = 'output window, operand 0, single buffered']
    %7 = vsyncpa [#allocation4], 0
    %8 = vsyncpa [#allocation7], 0
    %9 = vsyncpa [#allocation5], 0
    // Predicated region
    $region2: #{tpu_custom_call.1} parent=1 // pred_check
      _
    $region3: #{tpu_custom_call.1} parent=1 // pred_check_branch
      %11 = sbr.rel (0) target = $region5
    $region4: #{tpu_custom_call.1} parent=1 // pred_region
      %s13 = ssub.s32 32, 32
      %14 = vsyncadd [#allocation4], %s13
      %s16 = sshll.u32 [#allocation3], 4
      %s17 = int_to_ptr.vmem [resolvable:$true] %s16
      %19 = dma.hbm_to_vmem [thread:$0]  %s0, 32, %s17, [#allocation4]
    $region5: #{tpu_custom_call.1} parent=1 // pred_fallthru
      _
    // Predicated region
    $region6: #{tpu_custom_call.1} parent=1 // pred_check
      _
    $region7: #{tpu_custom_call.1} parent=1 // pred_check_branch
      %21 = sbr.rel (0) target = $region9
    $region8: #{tpu_custom_call.1} parent=1 // pred_region
      %s23 = ssub.s32 512, 512
      %24 = vsyncadd [#allocation7], %s23
      %s25 = sshll.u32 [#allocation6], 4
      %s26 = int_to_ptr.vmem [resolvable:$true] %s25
      %31 = dma.hbm_to_vmem [thread:$0]  %s1, 512, %s26, [#allocation7], 128, 128, 8
    $region9: #{tpu_custom_call.1} parent=1 // pred_fallthru
      _
    // Predicated region
    $region10: #{tpu_custom_call.1} parent=1 // pred_check
      _
    $region11: #{tpu_custom_call.1} parent=1 // pred_check_branch
      %33 = sbr.rel (0) target = $region13
    $region12: #{tpu_custom_call.1} parent=1 // pred_region
      %34 = dma.done [#allocation4], 32
    $region13: #{tpu_custom_call.1} parent=1 // pred_fallthru
      _
    // Predicated region
    $region14: #{tpu_custom_call.1} parent=1 // pred_check
      _
    $region15: #{tpu_custom_call.1} parent=1 // pred_check_branch
      %36 = sbr.rel (0) target = $region17
    $region16: #{tpu_custom_call.1} parent=1 // pred_region
      %37 = dma.done [#allocation7], 512
    $region17: #{tpu_custom_call.1} parent=1 // pred_fallthru
      _
    %v39 = vld [vmem:[#allocation3] sm:$0x3]
    %v40 = vunpack.c.0.s8 %v39
    %41 = vst [vmem:[#allocation2 + $0x70] sm:$0xff] 0
    %42 = vst [vmem:[#allocation2 + $0x78] sm:$0xff] 0
    %v43 = vlaneseq
    %v44 = vshrl.u32 %v43, 7
    %v45 = vadd.s32 %v44, 8
    %v46 = vadd.s32 %v44, 16
    %v47 = vadd.s32 %v44, 24
    %v48 = vadd.s32 %v44, 32
    %v49 = vadd.s32 %v44, 40
    %v50 = vadd.s32 %v44, 48
    %v51 = vadd.s32 %v44, 56
    %v52 = vadd.s32 %v44, 64
    %v53 = vadd.s32 %v44, 72
    %v54 = vadd.s32 %v44, 80
    %v55 = vadd.s32 %v44, 88
    %v56 = vadd.s32 %v44, 96
    %v57 = vadd.s32 %v44, 104
    %v58 = vadd.s32 %v44, 112
    %v59 = vadd.s32 %v44, 120
    %v60 = vlaneseq
    %v61 = vshrl.u32 %v60, 7
    %v62 = vsub.s32 0, %v61
    %v63 = vrot.slane %v40, %v62
    %vm64 = vcmp.eq.s32.totalorder %v44, %v63
    %vm65 = vcmp.eq.s32.totalorder %v45, %v63
    %vm66 = vcmp.eq.s32.totalorder %v46, %v63
    %vm67 = vcmp.eq.s32.totalorder %v47, %v63
    %vm68 = vcmp.eq.s32.totalorder %v48, %v63
    %vm69 = vcmp.eq.s32.totalorder %v49, %v63
    %vm70 = vcmp.eq.s32.totalorder %v50, %v63
    %vm71 = vcmp.eq.s32.totalorder %v51, %v63
    %vm72 = vcmp.eq.s32.totalorder %v52, %v63
    %vm73 = vcmp.eq.s32.totalorder %v53, %v63
    %vm74 = vcmp.eq.s32.totalorder %v54, %v63
    %vm75 = vcmp.eq.s32.totalorder %v55, %v63
    %vm76 = vcmp.eq.s32.totalorder %v56, %v63
    %vm77 = vcmp.eq.s32.totalorder %v57, %v63
    %vm78 = vcmp.eq.s32.totalorder %v58, %v63
    %vm79 = vcmp.eq.s32.totalorder %v59, %v63
    %v80 = vsel %vm64, 1, 0
    %v81 = vsel %vm65, 1, 0
    %v82 = vsel %vm66, 1, 0
    %v83 = vsel %vm67, 1, 0
    %v84 = vsel %vm68, 1, 0
    %v85 = vsel %vm69, 1, 0
    %v86 = vsel %vm70, 1, 0
    %v87 = vsel %vm71, 1, 0
    %v88 = vsel %vm72, 1, 0
    %v89 = vsel %vm73, 1, 0
    %v90 = vsel %vm74, 1, 0
    %v91 = vsel %vm75, 1, 0
    %v92 = vsel %vm76, 1, 0
    %v93 = vsel %vm77, 1, 0
    %v94 = vsel %vm78, 1, 0
    %v95 = vsel %vm79, 1, 0
    %v96 = vcvt.s32.f32 %v80
    %v97 = vcvt.s32.f32 %v81
    %v98 = vcvt.s32.f32 %v82
    %v99 = vcvt.s32.f32 %v83
    %v100 = vcvt.s32.f32 %v84
    %v101 = vcvt.s32.f32 %v85
    %v102 = vcvt.s32.f32 %v86
    %v103 = vcvt.s32.f32 %v87
    %v104 = vcvt.s32.f32 %v88
    %v105 = vcvt.s32.f32 %v89
    %v106 = vcvt.s32.f32 %v90
    %v107 = vcvt.s32.f32 %v91
    %v108 = vcvt.s32.f32 %v92
    %v109 = vcvt.s32.f32 %v93
    %v110 = vcvt.s32.f32 %v94
    %v111 = vcvt.s32.f32 %v95
    %v112 = vpack.c.bf16 %v97, %v96
    %v113 = vpack.c.bf16 %v99, %v98
    %v114 = vpack.c.bf16 %v101, %v100
    %v115 = vpack.c.bf16 %v103, %v102
    %v116 = vpack.c.bf16 %v105, %v104
    %v117 = vpack.c.bf16 %v107, %v106
    %v118 = vpack.c.bf16 %v109, %v108
    %v119 = vpack.c.bf16 %v111, %v110
    %120 = vst [vmem:[#allocation2] sm:$0xff] %v112
    %121 = vst [vmem:[#allocation2 + $0x8] sm:$0xff] %v113
    %122 = vst [vmem:[#allocation2 + $0x10] sm:$0xff] %v114
    %123 = vst [vmem:[#allocation2 + $0x18] sm:$0xff] %v115
    %124 = vst [vmem:[#allocation2 + $0x20] sm:$0xff] %v116
    %125 = vst [vmem:[#allocation2 + $0x28] sm:$0xff] %v117
    %126 = vst [vmem:[#allocation2 + $0x30] sm:$0xff] %v118
    %127 = vst [vmem:[#allocation2 + $0x38] sm:$0xff] %v119
    %v128 = vlaneseq
    %v129 = vshrl.u32 %v128, 7
    %v130 = vsub.s32 1, %v129
    %v131 = vrot.slane %v40, %v130
    %vm132 = vcmp.eq.s32.totalorder %v44, %v131
    %vm133 = vcmp.eq.s32.totalorder %v45, %v131
    %v134 = vsel %vm132, 1, 0
    %v135 = vsel %vm133, 1, 0
    %v136 = vcvt.s32.f32 %v134
    %v137 = vcvt.s32.f32 %v135
    %v138 = vpack.c.bf16 %v137, %v136
    %139 = vst [vmem:[#allocation2 + $0x40] sm:$0xff] %v138
    %v140 = vlaneseq
    %v141 = vshrl.u32 %v140, 7
    %v142 = vsub.s32 2, %v141
    %v143 = vrot.slane %v40, %v142
    %vm144 = vcmp.eq.s32.totalorder %v44, %v143
    %vm145 = vcmp.eq.s32.totalorder %v45, %v143
    %v146 = vsel %vm144, 1, 0
    %v147 = vsel %vm145, 1, 0
    %v148 = vcvt.s32.f32 %v146
    %v149 = vcvt.s32.f32 %v147
    %v150 = vpack.c.bf16 %v149, %v148
    %151 = vst [vmem:[#allocation2 + $0x48] sm:$0xff] %v150
    %v152 = vlaneseq
    %v153 = vshrl.u32 %v152, 7
    %v154 = vsub.s32 3, %v153
    %v155 = vrot.slane %v40, %v154
    %vm156 = vcmp.eq.s32.totalorder %v44, %v155
    %vm157 = vcmp.eq.s32.totalorder %v45, %v155
    %v158 = vsel %vm156, 1, 0
    %v159 = vsel %vm157, 1, 0
    %v160 = vcvt.s32.f32 %v158
    %v161 = vcvt.s32.f32 %v159
    %v162 = vpack.c.bf16 %v161, %v160
    %163 = vst [vmem:[#allocation2 + $0x50] sm:$0xff] %v162
    %v164 = vlaneseq
    %v165 = vshrl.u32 %v164, 7
    %v166 = vsub.s32 4, %v165
    %v167 = vrot.slane %v40, %v166
    %vm168 = vcmp.eq.s32.totalorder %v44, %v167
    %vm169 = vcmp.eq.s32.totalorder %v45, %v167
    %v170 = vsel %vm168, 1, 0
    %v171 = vsel %vm169, 1, 0
    %v172 = vcvt.s32.f32 %v170
    %v173 = vcvt.s32.f32 %v171
    %v174 = vpack.c.bf16 %v173, %v172
    %175 = vst [vmem:[#allocation2 + $0x58] sm:$0xff] %v174
    %v176 = vlaneseq
    %v177 = vshrl.u32 %v176, 7
    %v178 = vsub.s32 5, %v177
    %v179 = vrot.slane %v40, %v178
    %vm180 = vcmp.eq.s32.totalorder %v44, %v179
    %vm181 = vcmp.eq.s32.totalorder %v45, %v179
    %v182 = vsel %vm180, 1, 0
    %v183 = vsel %vm181, 1, 0
    %v184 = vcvt.s32.f32 %v182
    %v185 = vcvt.s32.f32 %v183
    %v186 = vpack.c.bf16 %v185, %v184
    %187 = vst [vmem:[#allocation2 + $0x60] sm:$0xff] %v186
    %v188 = vlaneseq
    %v189 = vshrl.u32 %v188, 7
    %v190 = vsub.s32 6, %v189
    %v191 = vrot.slane %v40, %v190
    %vm192 = vcmp.eq.s32.totalorder %v44, %v191
    %vm193 = vcmp.eq.s32.totalorder %v45, %v191
    %v194 = vsel %vm192, 1, 0
    %v195 = vsel %vm193, 1, 0
    %v196 = vcvt.s32.f32 %v194
    %v197 = vcvt.s32.f32 %v195
    %v198 = vpack.c.bf16 %v197, %v196
    %199 = vst [vmem:[#allocation2 + $0x68] sm:$0xff] %v198
    %v200 = vld [vmem:[#allocation6] sm:$0xff]
    %v201 = vld [vmem:[#allocation6 + $0x8] sm:$0xff]
    %v202 = vld [vmem:[#allocation6 + $0x10] sm:$0xff]
    %v203 = vld [vmem:[#allocation6 + $0x18] sm:$0xff]
    %v204 = vld [vmem:[#allocation2] sm:$0xff]
    %v205 = vld [vmem:[#allocation2 + $0x8] sm:$0xff]
    %v206 = vld [vmem:[#allocation2 + $0x10] sm:$0xff]
    %v207 = vld [vmem:[#allocation2 + $0x18] sm:$0xff]
    %v208 = vld [vmem:[#allocation2 + $0x20] sm:$0xff]
    %v209 = vld [vmem:[#allocation2 + $0x28] sm:$0xff]
    %v210 = vld [vmem:[#allocation2 + $0x30] sm:$0xff]
    %v211 = vld [vmem:[#allocation2 + $0x38] sm:$0xff]
    %v212 = vld [vmem:[#allocation2 + $0x40] sm:$0xff]
    %v213 = vld [vmem:[#allocation2 + $0x48] sm:$0xff]
    %v214 = vld [vmem:[#allocation2 + $0x50] sm:$0xff]
    %v215 = vld [vmem:[#allocation2 + $0x58] sm:$0xff]
    %v216 = vld [vmem:[#allocation2 + $0x60] sm:$0xff]
    %v217 = vld [vmem:[#allocation2 + $0x68] sm:$0xff]
    %v218 = vld [vmem:[#allocation2 + $0x70] sm:$0xff]
    %v219 = vld [vmem:[#allocation2 + $0x78] sm:$0xff]
    %v224 = vunpack.c.l.b16 %v200
    %v225 = vunpack.c.h.b16 %v200
    %v226 = vunpack.c.l.b16 %v201
    %v227 = vunpack.c.h.b16 %v201
    %v228 = vunpack.c.l.b16 %v202
    %v229 = vunpack.c.h.b16 %v202
    %v230 = vunpack.c.l.b16 %v203
    %v231 = vunpack.c.h.b16 %v203
    %v232 = vpack.c.b16 %v226, %v224
    %v233 = vpack.c.b16 %v227, %v225
    %v234 = vpack.c.b16 %v230, %v228
    %v235 = vpack.c.b16 %v231, %v229
    %240 = vmatprep.subr.bf16.mxu0 0
    %241 = vmatpush1.bf16.msra.mxu0 %v204
    %242 = vmatprep.subr.bf16.mxu0 0
    %243 = vmatpush1.bf16.msra.mxu0 %v205
    %244 = vmatprep.subr.bf16.mxu0 0
    %245 = vmatpush1.bf16.msra.mxu0 %v206
    %246 = vmatprep.subr.bf16.mxu0 0
    %247 = vmatpush1.bf16.msra.mxu0 %v207
    %248 = vmatprep.subr.bf16.mxu0 0
    %249 = vmatpush1.bf16.msra.mxu0 %v208
    %250 = vmatprep.subr.bf16.mxu0 0
    %251 = vmatpush1.bf16.msra.mxu0 %v209
    %252 = vmatprep.subr.bf16.mxu0 0
    %253 = vmatpush1.bf16.msra.mxu0 %v210
    %254 = vmatprep.subr.bf16.mxu0 0
    %255 = vmatpush1.bf16.msra.mxu0 %v211
    %256 = vmatprep.subr.bf16.mxu0 0
    %257 = vmatpush1.bf16.msra.mxu0 %v212
    %258 = vmatprep.subr.bf16.mxu0 0
    %259 = vmatpush1.bf16.msra.mxu0 %v213
    %260 = vmatprep.subr.bf16.mxu0 0
    %261 = vmatpush1.bf16.msra.mxu0 %v214
    %262 = vmatprep.subr.bf16.mxu0 0
    %263 = vmatpush1.bf16.msra.mxu0 %v215
    %264 = vmatprep.subr.bf16.mxu0 0
    %265 = vmatpush1.bf16.msra.mxu0 %v216
    %266 = vmatprep.subr.bf16.mxu0 0
    %267 = vmatpush1.bf16.msra.mxu0 %v217
    %268 = vmatprep.subr.bf16.mxu0 0
    %269 = vmatpush1.bf16.msra.mxu0 %v218
    %270 = vmatprep.subr.bf16.mxu0 0
    %271 = vmatpush1.bf16.msra.mxu0 %v219
    %272 = vmatprep.mubr.bf16.mxu0 %v233
    %273 = vmatmul.mubr.bf16.gmra.mrb[0].mxu0 %v232
    %v274 = vpop.f32.mrb[0].mxu0
    %v275 = vadd.f32 0.0, %v274
    %v276 = vpop.f32.mrb[0].mxu0
    %v277 = vpop.f32.mrb[0].mxu0
    %v278 = vadd.f32 0.0, %v277
    %v279 = vpop.f32.mrb[0].mxu0
    %280 = vmatprep.mubr.bf16.mxu0 %v235
    %281 = vmatmul.mubr.bf16.gmra.mrb[0].mxu0 %v234
    %v282 = vpop.f32.mrb[0].mxu0
    %v283 = vadd.f32 0.0, %v282
    %v284 = vpop.f32.mrb[0].mxu0
    %v285 = vpop.f32.mrb[0].mxu0
    %v286 = vadd.f32 0.0, %v285
    %v287 = vpop.f32.mrb[0].mxu0
    %288 = vdwg.mxu0
    %289 = vst [vmem:[#allocation8] sm:$0xff] %v275
    %290 = vst [vmem:[#allocation8 + $0x8] sm:$0xff] %v278
    %291 = vst [vmem:[#allocation8 + $0x10] sm:$0xff] %v283
    %292 = vst [vmem:[#allocation8 + $0x18] sm:$0xff] %v286
    // Predicated region
    $region18: #{tpu_custom_call.1} parent=1 // pred_check
      _
    $region19: #{tpu_custom_call.1} parent=1 // pred_check_branch
      %294 = sbr.rel (0) target = $region21
    $region20: #{tpu_custom_call.1} parent=1 // pred_region
      %s296 = ssub.s32 512, 512
      %297 = vsyncadd [#allocation5], %s296
      %s298 = sshll.u32 [#allocation8], 4
      %s299 = int_to_ptr.vmem [resolvable:$true] %s298
      %304 = dma.vmem_to_hbm [thread:$0]  %s299, 512, %s2, [#allocation5], 128, 128, 8
    $region21: #{tpu_custom_call.1} parent=1 // pred_fallthru
      _
    // Predicated region
    $region22: #{tpu_custom_call.1} parent=1 // pred_check
      _
    $region23: #{tpu_custom_call.1} parent=1 // pred_check_branch
      %306 = sbr.rel (0) target = $region25
    $region24: #{tpu_custom_call.1} parent=1 // pred_region
      %307 = dma.done [#allocation5], 512
    $region25: #{tpu_custom_call.1} parent=1 // pred_fallthru
      _
    %308 = vsyncpa [#allocation4], 1
    %309 = vsyncpa [#allocation7], 1
    %310 = vsyncpa [#allocation5], 1

</llo_original>
